<compile_context>
chip_gen: v5e
topology: v5e:2x2
jax: 0.10.0
libtpu: 0.0.40
codegen_flags: <defaults>
</compile_context>

<pallas_src>
import functools

import jax
import jax.numpy as jnp
from jax.experimental import pallas as pl
from jax.experimental.pallas import tpu as pltpu

LANE = 128
MAX_BLOCK_ROWS = 4096  # 4096*128*4B = 2 MiB per f32 input block


def _round_up(x, m):
    return ((x + m - 1) // m) * m


def _sublane_packing(dtype):
    # f32 -> 8 rows/tile, bf16 -> 16, int8/fp8 -> 32.
    itemsize = jnp.dtype(dtype).itemsize
    return max(8, (4 // max(1, itemsize)) * 8)


def _wmse_kernel(p_ref, t_ref, o_ref, acc_ref, *, block_rows, total_rows):
    # Grid: (steps,) over the row axis (reduction, "arbitrary").
    # acc_ref: (8, 128) f32 VMEM scratch, resident across the grid.
    # o_ref:   (1, 1) f32 SMEM block, written once on the last step.
    s = pl.program_id(0)

    @pl.when(s == 0)
    def _():
        acc_ref[...] = jnp.zeros_like(acc_ref)

    # In-kernel cast only (wrapper never upcasts the HBM slab).  f32 math is
    # correct on all generations; bf16 inputs still stream half the HBM bytes.
    p = p_ref[...].astype(jnp.float32)
    t = t_ref[...].astype(jnp.float32)
    diff = p - t
    term = diff * diff * (t + 0.001)  # (block_rows, 128)

    if total_rows % block_rows != 0:
        # Ragged last block: zero the whole contribution of out-of-bounds rows
        # (Pallas-delivered padding is undefined, not zero).  Compile-time gated;
        # a handful of VPU ops per step.
        row_ids = jax.lax.broadcasted_iota(jnp.int32, (block_rows, LANE), 0)
        global_rows = s * block_rows + row_ids
        term = jnp.where(global_rows < total_rows, term, 0.0)

    # Sublane-aligned reshape + axis-0 reduce: pure VPU vreg adds into the small
    # resident accumulator (no per-step XLU reduce, no big accumulator traffic).
    acc_ref[...] += jnp.sum(term.reshape(block_rows // 8, 8, LANE), axis=0)

    @pl.when(s == pl.num_programs(0) - 1)
    def _():
        o_ref[0, 0] = jnp.sum(acc_ref[...])


def weighted_mse_loss(predicted, target):
    assert predicted.shape == target.shape
    n = predicted.size
    itemsize = jnp.dtype(predicted.dtype).itemsize

    p_flat = jnp.reshape(predicted, (-1,))
    t_flat = jnp.reshape(target, (-1,))

    rem = n % LANE
    main = n - rem

    # Tiny XLA epilogue for the (<128-element) non-lane-aligned tail; avoids any
    # full-array pad pass.
    tail_sum = jnp.float32(0.0)
    if rem:
        pt = p_flat[main:].astype(jnp.float32)
        tt = t_flat[main:].astype(jnp.float32)
        d = pt - tt
        tail_sum = jnp.sum(d * d * (tt + 0.001))

    if main == 0:
        return tail_sum

    rows = main // LANE
    packing = _sublane_packing(predicted.dtype)
    block_rows = min(MAX_BLOCK_ROWS, _round_up(rows, packing))
    steps = pl.cdiv(rows, block_rows)

    # Zero-copy view of the lane-aligned main part: no jnp.pad, no astype.
    p2 = p_flat[:main].reshape(rows, LANE)
    t2 = t_flat[:main].reshape(rows, LANE)

    kernel = functools.partial(
        _wmse_kernel, block_rows=block_rows, total_rows=rows
    )

    cost = pl.CostEstimate(
        flops=5 * main,
        transcendentals=0,
        bytes_accessed=2 * main * itemsize + 4,
    )

    out = pl.pallas_call(
        kernel,
        out_shape=jax.ShapeDtypeStruct((1, 1), jnp.float32),
        grid_spec=pltpu.PrefetchScalarGridSpec(
            num_scalar_prefetch=0,
            grid=(steps,),
            in_specs=[
                pl.BlockSpec((block_rows, LANE), lambda s: (s, 0)),
                pl.BlockSpec((block_rows, LANE), lambda s: (s, 0)),
            ],
            out_specs=pl.BlockSpec(
                (1, 1), lambda s: (0, 0), memory_space=pltpu.SMEM
            ),
            scratch_shapes=[pltpu.VMEM((8, LANE), jnp.float32)],
        ),
        compiler_params=pltpu.CompilerParams(
            dimension_semantics=("arbitrary",),
            vmem_limit_bytes=32 * 1024 * 1024,
        ),
        cost_estimate=cost,
    )(p2, t2)

    return out[0, 0] + tail_sum


def weighted_mse_loss_ref(predicted, target):
    loss = (predicted - target) ** 2
    return jnp.sum(loss * (target + 0.001))


if __name__ == "__main__":
    key = jax.random.PRNGKey(0)
    k1, k2 = jax.random.split(key)
    shape = (2, 4, 16, 16)
    predicted = jax.random.normal(k1, shape, dtype=jnp.float32)
    target = jax.random.normal(k2, shape, dtype=jnp.float32)

    out = weighted_mse_loss(predicted, target)
    out = jax.block_until_ready(out)

    ref = weighted_mse_loss_ref(predicted, target)
    assert jnp.allclose(out, ref, rtol=1e-5, atol=1e-5), (out, ref)
    print("KERNEL_OK")
</pallas_src>

<mosaic_0001>
module attributes {stable_mosaic.version = 11 : i64} {
  func.func @_wmse_kernel(%arg0: i32, %arg1: memref<16x128xf32, #tpu.memory_space<vmem>>, %arg2: memref<16x128xf32, #tpu.memory_space<vmem>>, %arg3: memref<1x1xf32, #tpu.memory_space<smem>>, %arg4: memref<8x128xf32, #tpu.memory_space<vmem>>) attributes {dimension_semantics = [#tpu.dimension_semantics<arbitrary>], iteration_bounds = array<i64: 1>, scalar_prefetch = 0 : i64, scratch_operands = 1 : i64, tpu.core_type = #tpu.core_type<tc>, window_params = [{transform_indices = @transform_0, window_bounds = array<i64: 16, 128>}, {transform_indices = @transform_1, window_bounds = array<i64: 16, 128>}, {transform_indices = @transform_2, window_bounds = array<i64: 1, 1>}]} {
    %c0_i32 = arith.constant 0 : i32
    %0 = arith.cmpi eq, %arg0, %c0_i32 : i32
    %1 = arith.extui %0 : i1 to i32
    %c0_i32_0 = arith.constant 0 : i32
    %2 = arith.cmpi ne, %1, %c0_i32_0 : i32
    scf.if %2 {
      %cst_11 = arith.constant 0.000000e+00 : f32
      %18 = vector.broadcast %cst_11 : f32 to vector<8x128xf32>
      %c0_12 = arith.constant 0 : index
      %c0_13 = arith.constant 0 : index
      %19 = vector.load %arg4[%c0_12, %c0_13] : memref<8x128xf32, #tpu.memory_space<vmem>>, vector<8x128xf32>
      tpu.vector_store %arg4[%c0_12, %c0_13], %18 {strides = array<i32>} : memref<8x128xf32, #tpu.memory_space<vmem>>, vector<8x128xf32>,
    } else {
    }
    %c0 = arith.constant 0 : index
    %c0_1 = arith.constant 0 : index
    %3 = vector.load %arg1[%c0, %c0_1] : memref<16x128xf32, #tpu.memory_space<vmem>>, vector<16x128xf32>
    %c0_2 = arith.constant 0 : index
    %c0_3 = arith.constant 0 : index
    %4 = vector.load %arg2[%c0_2, %c0_3] : memref<16x128xf32, #tpu.memory_space<vmem>>, vector<16x128xf32>
    %5 = arith.subf %3, %4 : vector<16x128xf32>
    %6 = arith.mulf %5, %5 : vector<16x128xf32>
    %cst = arith.constant 1.000000e-03 : f32
    %7 = vector.broadcast %cst : f32 to vector<16x128xf32>
    %8 = arith.addf %4, %7 : vector<16x128xf32>
    %9 = arith.mulf %6, %8 : vector<16x128xf32>
    %c0_4 = arith.constant 0 : index
    %c0_5 = arith.constant 0 : index
    %10 = vector.load %arg4[%c0_4, %c0_5] : memref<8x128xf32, #tpu.memory_space<vmem>>, vector<8x128xf32>
    %11 = vector.shape_cast %9 : vector<16x128xf32> to vector<2x8x128xf32>
    %cst_6 = arith.constant dense<0.000000e+00> : vector<8x128xf32>
    %12 = vector.multi_reduction <add>, %11, %cst_6 [0] : vector<2x8x128xf32> to vector<8x128xf32>
    %13 = arith.addf %10, %12 : vector<8x128xf32>
    %c0_7 = arith.constant 0 : index
    %c0_8 = arith.constant 0 : index
    %14 = vector.load %arg4[%c0_7, %c0_8] : memref<8x128xf32, #tpu.memory_space<vmem>>, vector<8x128xf32>
    tpu.vector_store %arg4[%c0_7, %c0_8], %13 {strides = array<i32>} : memref<8x128xf32, #tpu.memory_space<vmem>>, vector<8x128xf32>,
    %c0_i32_9 = arith.constant 0 : i32
    %15 = arith.cmpi eq, %arg0, %c0_i32_9 : i32
    %16 = arith.extui %15 : i1 to i32
    %c0_i32_10 = arith.constant 0 : i32
    %17 = arith.cmpi ne, %16, %c0_i32_10 : i32
    scf.if %17 {
      %c0_11 = arith.constant 0 : index
      %c0_12 = arith.constant 0 : index
      %18 = vector.load %arg4[%c0_11, %c0_12] : memref<8x128xf32, #tpu.memory_space<vmem>>, vector<8x128xf32>
      %19 = vector.shape_cast %18 : vector<8x128xf32> to vector<1x8x128xf32>
      %cst_13 = arith.constant dense<0.000000e+00> : vector<1xf32>
      %20 = vector.multi_reduction <add>, %19, %cst_13 [1, 2] : vector<1x8x128xf32> to vector<1xf32>
      %21 = vector.shape_cast %20 : vector<1xf32> to vector<1x1x1xf32>
      %22 = vector.extract %21[0, 0, 0] : f32 from vector<1x1x1xf32>
      %c0_14 = arith.constant 0 : index
      %c0_15 = arith.constant 0 : index
      %23 = memref.load %arg3[%c0_14, %c0_15] : memref<1x1xf32, #tpu.memory_space<smem>>
      memref.store %22, %arg3[%c0_14, %c0_15] : memref<1x1xf32, #tpu.memory_space<smem>>
    } else {
    }
    return
  }
  func.func @transform_0(%arg0: i32) -> (i32, i32) {
    %c0_i32 = arith.constant 0 : i32
    %c0_i32_0 = arith.constant 0 : i32
    return %arg0, %c0_i32 : i32, i32
  }
  func.func @transform_1(%arg0: i32) -> (i32, i32) {
    %c0_i32 = arith.constant 0 : i32
    %c0_i32_0 = arith.constant 0 : i32
    return %arg0, %c0_i32 : i32, i32
  }
  func.func @transform_2(%arg0: i32) -> (i32, i32) {
    %c0_i32 = arith.constant 0 : i32
    %c0_i32_0 = arith.constant 0 : i32
    %c0_i32_1 = arith.constant 0 : i32
    return %c0_i32, %c0_i32_0 : i32, i32
  }
}

</mosaic_0001>

<llo_original>
// kernel: tpu_custom_call.1
$region0: #{tpu_custom_call.1}
  #allocation0 [shape = 'u32[]', space=smem, size = 0x4, offset = 0x4, fixed_abs, tag = 'smem constant byte address 0x4 - core index']
  #allocation1 [shape = 'u32[72,128]{1,0:T(1,128)}', space=vmem, size = 0x9000, scoped, tag = 'internal scratch']
  #allocation2 [shape = 'f32[8,128]{1,0:T(8,128)}', space=vmem, size = 0x1000, scoped, tag = 'scratch operand']
  %s0 = inlined_call_operand.hbm [shape: f32[16,128], index: 0, kind: input, shape index: {}]
  %s1 = inlined_call_operand.hbm [shape: f32[16,128], index: 1, kind: input, shape index: {}]
  %s2 = inlined_call_operand.hbm [shape: f32[1,1], index: 2, kind: output, shape index: {}]
  %s3 = sld [smem:[#allocation0]]
  $region34: #{tpu_custom_call.1} parent=0
    _
  %s5 = ssub.s32 1, %s3
  %s6 = scalar_select 0, %s5, %s3
  $region1: #{tpu_custom_call.1} parent=0
    #allocation3 [shape = 'u8[8192]{0}', space=vmem, size = 0x2000, scoped, tag = 'input window, operand 0, single buffered']
    #allocation4 [shape = 's32[1]{0}', space=sflag, size = 0x4, scoped, tag = 'scoped memory for tpu_custom_call.1']
    #allocation5 [shape = 's32[1]{0}', space=sflag, size = 0x4, scoped, tag = 'scoped memory for tpu_custom_call.1']
    #allocation6 [shape = 'u8[8192]{0}', space=vmem, size = 0x2000, scoped, tag = 'input window, operand 1, single buffered']
    #allocation7 [shape = 's32[1]{0}', space=sflag, size = 0x4, scoped, tag = 'scoped memory for tpu_custom_call.1']
    #allocation8 [shape = 'u8[512]{0}', space=smem, size = 0x200, scoped, tag = 'output window, operand 0, single buffered']
    %7 = vsyncpa [#allocation4], 0
    %8 = vsyncpa [#allocation7], 0
    %9 = vsyncpa [#allocation5], 0
    // Predicated region
    $region2: #{tpu_custom_call.1} parent=1 // pred_check
      _
    $region3: #{tpu_custom_call.1} parent=1 // pred_check_branch
      %11 = sbr.rel (0) target = $region5
    $region4: #{tpu_custom_call.1} parent=1 // pred_region
      %13 = vsyncadd [#allocation4], 0
      %s14 = sshll.u32 %s0, 4
      %s15 = int_to_ptr.hbm [resolvable:$true] %s14
      %s16 = sshll.u32 [#allocation3], 4
      %s17 = int_to_ptr.vmem [resolvable:$true] %s16
      %22 = dma.hbm_to_vmem [thread:$0]  %s15, 256, %s17, [#allocation4], 128, 128, 8
    $region5: #{tpu_custom_call.1} parent=1 // pred_fallthru
      _
    // Predicated region
    $region6: #{tpu_custom_call.1} parent=1 // pred_check
      _
    $region7: #{tpu_custom_call.1} parent=1 // pred_check_branch
      %24 = sbr.rel (0) target = $region9
    $region8: #{tpu_custom_call.1} parent=1 // pred_region
      %26 = vsyncadd [#allocation7], 0
      %s27 = sshll.u32 %s1, 4
      %s28 = int_to_ptr.hbm [resolvable:$true] %s27
      %s29 = sshll.u32 [#allocation6], 4
      %s30 = int_to_ptr.vmem [resolvable:$true] %s29
      %35 = dma.hbm_to_vmem [thread:$0]  %s28, 256, %s30, [#allocation7], 128, 128, 8
    $region9: #{tpu_custom_call.1} parent=1 // pred_fallthru
      _
    // Predicated region
    $region10: #{tpu_custom_call.1} parent=1 // pred_check
      _
    $region11: #{tpu_custom_call.1} parent=1 // pred_check_branch
      %37 = sbr.rel (0) target = $region13
    $region12: #{tpu_custom_call.1} parent=1 // pred_region
      %39 = dma.done [#allocation4], 256
    $region13: #{tpu_custom_call.1} parent=1 // pred_fallthru
      _
    // Predicated region
    $region14: #{tpu_custom_call.1} parent=1 // pred_check
      _
    $region15: #{tpu_custom_call.1} parent=1 // pred_check_branch
      %41 = sbr.rel (0) target = $region17
    $region16: #{tpu_custom_call.1} parent=1 // pred_region
      %43 = dma.done [#allocation7], 256
    $region17: #{tpu_custom_call.1} parent=1 // pred_fallthru
      _
    %p44 = scmp.eq.s32.totalorder 0, 0
    // Predicated region
    $region18: #{tpu_custom_call.1} parent=1 // pred_check
      %p45 = pneg %p44
    $region19: #{tpu_custom_call.1} parent=1 // pred_check_branch
      %47 = sbr.rel (%p45) target = $region21
    $region20: #{tpu_custom_call.1} parent=1 // pred_region
      %48 = vst [vmem:[#allocation2] sm:$0xff] 0.0
    $region21: #{tpu_custom_call.1} parent=1 // pred_fallthru
      _
    %v49 = vld [vmem:[#allocation3] sm:$0xff]
    %v50 = vld [vmem:[#allocation3 + $0x8] sm:$0xff]
    %v51 = vld [vmem:[#allocation6] sm:$0xff]
    %v52 = vld [vmem:[#allocation6 + $0x8] sm:$0xff]
    %v53 = vsub.f32 %v49, %v51
    %v54 = vsub.f32 %v50, %v52
    %v55 = vmul.f32 %v53, %v53
    %v56 = vmul.f32 %v54, %v54
    %v57 = vadd.f32 %v51, 0.001
    %v58 = vadd.f32 %v52, 0.001
    %v59 = vmul.f32 %v55, %v57
    %v60 = vmul.f32 %v56, %v58
    %v61 = vld [vmem:[#allocation2] sm:$0xff]
    %v62 = vadd.f32 %v59, %v60
    %v63 = vadd.f32 %v61, %v62
    %64 = vst [vmem:[#allocation2] sm:$0xff] %v63
    // Predicated region
    $region22: #{tpu_custom_call.1} parent=1 // pred_check
      %p65 = pneg %p44
    $region23: #{tpu_custom_call.1} parent=1 // pred_check_branch
      %67 = sbr.rel (%p65) target = $region25
    $region24: #{tpu_custom_call.1} parent=1 // pred_region
      %v68 = vld [vmem:[#allocation2] sm:$0xff]
      %69 = vadd.xlane.f32.xlu0 %v68
      %v70 = vpop.xlane.xlu0 %69
      %v71 = vrot.slane %v70, 4
      %v72 = vadd.f32 %v70, %v71
      %v73 = vrot.slane %v72, 2
      %v74 = vadd.f32 %v72, %v73
      %v75 = vrot.slane %v74, 1
      %v76 = vadd.f32 %v74, %v75
      %s77 = vtos %v76
      %s78 = scalar_lea.smem [#allocation8], 0
      %79 = sst [smem:[%s78]] %s77
    $region25: #{tpu_custom_call.1} parent=1 // pred_fallthru
      _
    // Predicated region
    $region26: #{tpu_custom_call.1} parent=1 // pred_check
      _
    $region27: #{tpu_custom_call.1} parent=1 // pred_check_branch
      %81 = sbr.rel (0) target = $region29
    $region28: #{tpu_custom_call.1} parent=1 // pred_region
      %83 = vsyncadd [#allocation5], 0
      %s85 = sshll.u32 %s2, 4
      %s86 = int_to_ptr.hbm [resolvable:$true] %s85
      %88 = dma.smem_to_hbm [#allocation8], 16, %s86, [#allocation5]
    $region29: #{tpu_custom_call.1} parent=1 // pred_fallthru
      _
    // Predicated region
    $region30: #{tpu_custom_call.1} parent=1 // pred_check
      _
    $region31: #{tpu_custom_call.1} parent=1 // pred_check_branch
      %90 = sbr.rel (0) target = $region33
    $region32: #{tpu_custom_call.1} parent=1 // pred_region
      %92 = dma.done [#allocation5], 16
    $region33: #{tpu_custom_call.1} parent=1 // pred_fallthru
      _
    %93 = sfence
    %94 = vsyncpa [#allocation4], 1
    %95 = vsyncpa [#allocation7], 1
    %96 = vsyncpa [#allocation5], 1

</llo_original>
